<compile_context>
chip_gen: v7x
topology: tpu7x:2x2x1
jax: 0.10.0
libtpu: 0.0.40
codegen_flags: <defaults>
</compile_context>

<pallas_src>
import functools

import jax
import jax.numpy as jnp
from jax.experimental import pallas as pl
from jax.experimental.pallas import tpu as pltpu

DROPOUT_P = 0.3
HIDDEN = 124          # logical hidden width (matches the PyTorch module)
HPAD = 128            # lane-dense padded hidden width
OUT_PAD = 128         # lane-dense padded class width

_KEEP_THRESHOLD = int(round(DROPOUT_P * (1 << 32)))   # bits <  thr -> drop
_INV_KEEP = 1.0 / (1.0 - DROPOUT_P)


def _round_up(n, m):
    return ((n + m - 1) // m) * m


def _pad_to(a, shape):
    pads = [(0, t - s) for s, t in zip(a.shape, shape)]
    return jnp.pad(a, pads)


def _random_bits(shape, seed_u32, salt, row_offset_u32):
    """Deterministic uint32 bits per (global_row, col) via a lowbias32-style hash."""
    r = jax.lax.broadcasted_iota(jnp.int32, shape, 0).astype(jnp.uint32) + row_offset_u32
    c = jax.lax.broadcasted_iota(jnp.int32, shape, 1).astype(jnp.uint32)
    x = (r * jnp.uint32(0x9E3779B1)
         + c * jnp.uint32(0x85EBCA6B)
         + seed_u32 * jnp.uint32(0xC2B2AE35)
         + jnp.uint32(salt))
    x = x ^ (x >> 16)
    x = x * jnp.uint32(0x7FEB352D)
    x = x ^ (x >> 15)
    x = x * jnp.uint32(0x846CA68B)
    x = x ^ (x >> 16)
    return x


def _dropout(h, bits):
    """Inverted dropout: keep with prob (1-p), scale kept values by 1/(1-p)."""
    keep = bits >= jnp.uint32(_KEEP_THRESHOLD)
    return jnp.where(keep, h * jnp.float32(_INV_KEEP), jnp.float32(0.0))


def _mlp_kernel(seed_ref, x_ref, w1_ref, b1_ref, w2_ref, b2_ref,
                w3_ref, b3_ref, o_ref, *, tile_b):
    seed_u = seed_ref[0].astype(jnp.uint32)
    row0_u = (pl.program_id(0) * tile_b).astype(jnp.uint32)

    x = x_ref[...].astype(jnp.float32)

    # layer1: Linear(input_dim -> 124[pad 128]) + Dropout(0.3) + ReLU
    h = jnp.dot(x, w1_ref[...], preferred_element_type=jnp.float32) + b1_ref[...]
    h = _dropout(h, _random_bits(h.shape, seed_u, 0x1111, row0_u))
    h = jnp.maximum(h, 0.0)

    # layer2: Linear(124 -> 124[pad 128]) + Dropout(0.3) + ReLU
    h = jnp.dot(h, w2_ref[...], preferred_element_type=jnp.float32) + b2_ref[...]
    h = _dropout(h, _random_bits(h.shape, seed_u, 0x2222, row0_u))
    h = jnp.maximum(h, 0.0)

    # layer3: Linear(124 -> num_classes[pad 128])
    y = jnp.dot(h, w3_ref[...], preferred_element_type=jnp.float32) + b3_ref[...]
    o_ref[...] = y.astype(o_ref.dtype)


def two_layer_mlp_dropout_pallas(x, params, seed, *, tile_b=None):
    """x: [B, input_dim] f32. params: w*/b* with w: [in, out], b: [1, out]."""
    w1, b1 = params["w1"], params["b1"]
    w2, b2 = params["w2"], params["b2"]
    w3, b3 = params["w3"], params["b3"]

    B, K = x.shape
    num_classes = w3.shape[1]

    # Zero-pad hidden / class dims to 128 (lane-dense MXU tiles & stores).
    w1p = _pad_to(w1.astype(jnp.float32), (K, HPAD))
    b1p = _pad_to(b1.astype(jnp.float32), (1, HPAD))
    w2p = _pad_to(w2.astype(jnp.float32), (HPAD, HPAD))
    b2p = _pad_to(b2.astype(jnp.float32), (1, HPAD))
    w3p = _pad_to(w3.astype(jnp.float32), (HPAD, OUT_PAD))
    b3p = _pad_to(b3.astype(jnp.float32), (1, OUT_PAD))

    # Batch tile: multiple of 8, large enough to feed the MXU, small enough
    # to stay far below the v7x 32 MiB scoped-VMEM limit with double buffers.
    if tile_b is None:
        tile_b = min(512, _round_up(B, 8))
    Bp = _round_up(B, tile_b)
    xp = _pad_to(x.astype(jnp.float32), (Bp, K))

    num_tiles = Bp // tile_b
    seed_arr = jnp.asarray([seed], dtype=jnp.int32)

    flops = 2 * Bp * (K * HPAD + HPAD * HPAD + HPAD * OUT_PAD)
    bytes_accessed = 4 * (Bp * K + Bp * OUT_PAD
                          + K * HPAD + HPAD * HPAD + HPAD * OUT_PAD
                          + 2 * HPAD + OUT_PAD)

    out_padded = pl.pallas_call(
        functools.partial(_mlp_kernel, tile_b=tile_b),
        out_shape=jax.ShapeDtypeStruct((Bp, OUT_PAD), jnp.float32),
        grid=(num_tiles,),
        in_specs=[
            pl.BlockSpec(memory_space=pltpu.MemorySpace.SMEM),        # seed
            pl.BlockSpec((tile_b, K), lambda i: (i, 0)),              # x tile
            pl.BlockSpec((K, HPAD), lambda i: (0, 0)),                # w1 (resident)
            pl.BlockSpec((1, HPAD), lambda i: (0, 0)),                # b1
            pl.BlockSpec((HPAD, HPAD), lambda i: (0, 0)),             # w2
            pl.BlockSpec((1, HPAD), lambda i: (0, 0)),                # b2
            pl.BlockSpec((HPAD, OUT_PAD), lambda i: (0, 0)),          # w3
            pl.BlockSpec((1, OUT_PAD), lambda i: (0, 0)),             # b3
        ],
        out_specs=pl.BlockSpec((tile_b, OUT_PAD), lambda i: (i, 0)),
        compiler_params=pltpu.CompilerParams(
            dimension_semantics=("parallel",)),
        cost_estimate=pl.CostEstimate(
            flops=flops, transcendentals=0, bytes_accessed=bytes_accessed),
    )(seed_arr, xp, w1p, b1p, w2p, b2p, w3p, b3p)

    return out_padded[:B, :num_classes]


def init_params(key, input_dim, num_classes=2):
    """Deterministic init mimicking nn.Linear default (U(-1/sqrt(fan_in), ..))."""
    ks = jax.random.split(key, 6)

    def linear(kw, kb, fan_in, fan_out):
        bound = 1.0 / jnp.sqrt(fan_in)
        w = jax.random.uniform(kw, (fan_in, fan_out), jnp.float32, -bound, bound)
        b = jax.random.uniform(kb, (1, fan_out), jnp.float32, -bound, bound)
        return w, b

    w1, b1 = linear(ks[0], ks[1], input_dim, HIDDEN)
    w2, b2 = linear(ks[2], ks[3], HIDDEN, HIDDEN)
    w3, b3 = linear(ks[4], ks[5], HIDDEN, num_classes)
    return {"w1": w1, "b1": b1, "w2": w2, "b2": b2, "w3": w3, "b3": b3}


if __name__ == "__main__":
    key = jax.random.PRNGKey(0)
    k_param, k_x = jax.random.split(key)

    batch = 8
    input_dim = 32
    num_classes = 2

    params = init_params(k_param, input_dim, num_classes)
    x = jax.random.normal(k_x, (batch, input_dim), dtype=jnp.float32)

    out = two_layer_mlp_dropout_pallas(x, params, seed=0)
    out = jax.block_until_ready(out)

    assert out.shape == (batch, num_classes)
    assert out.dtype == jnp.float32
    assert bool(jnp.all(jnp.isfinite(out)))
    print("KERNEL_OK")
</pallas_src>

<mosaic_0001>
module attributes {stable_mosaic.version = 11 : i64} {
  func.func @_mlp_kernel(%arg0: i32, %arg1: memref<1xi32, #tpu.memory_space<smem>>, %arg2: memref<8x32xf32, #tpu.memory_space<vmem>>, %arg3: memref<32x128xf32, #tpu.memory_space<vmem>>, %arg4: memref<1x128xf32, #tpu.memory_space<vmem>>, %arg5: memref<128x128xf32, #tpu.memory_space<vmem>>, %arg6: memref<1x128xf32, #tpu.memory_space<vmem>>, %arg7: memref<128x128xf32, #tpu.memory_space<vmem>>, %arg8: memref<1x128xf32, #tpu.memory_space<vmem>>, %arg9: memref<8x128xf32, #tpu.memory_space<vmem>>) attributes {dimension_semantics = [#tpu.dimension_semantics<parallel>], iteration_bounds = array<i64: 1>, scalar_prefetch = 0 : i64, scratch_operands = 0 : i64, tpu.core_type = #tpu.core_type<tc>, window_params = [{transform_indices = @transform_0, window_bounds = array<i64: 1>}, {transform_indices = @transform_1, window_bounds = array<i64: 8, 32>}, {pipeline_mode = #tpu.pipeline_mode<synchronous>, transform_indices = @transform_2, window_bounds = array<i64: 32, 128>}, {pipeline_mode = #tpu.pipeline_mode<synchronous>, transform_indices = @transform_3, window_bounds = array<i64: 1, 128>}, {pipeline_mode = #tpu.pipeline_mode<synchronous>, transform_indices = @transform_4, window_bounds = array<i64: 128, 128>}, {pipeline_mode = #tpu.pipeline_mode<synchronous>, transform_indices = @transform_5, window_bounds = array<i64: 1, 128>}, {pipeline_mode = #tpu.pipeline_mode<synchronous>, transform_indices = @transform_6, window_bounds = array<i64: 128, 128>}, {pipeline_mode = #tpu.pipeline_mode<synchronous>, transform_indices = @transform_7, window_bounds = array<i64: 1, 128>}, {transform_indices = @transform_8, window_bounds = array<i64: 8, 128>}]} {
    %c0 = arith.constant 0 : index
    %0 = memref.load %arg1[%c0] : memref<1xi32, #tpu.memory_space<smem>>
    %c8_i32 = arith.constant 8 : i32
    %1 = arith.muli %arg0, %c8_i32 : i32
    %c0_0 = arith.constant 0 : index
    %c0_1 = arith.constant 0 : index
    %2 = vector.load %arg2[%c0_0, %c0_1] : memref<8x32xf32, #tpu.memory_space<vmem>>, vector<8x32xf32>
    %c0_2 = arith.constant 0 : index
    %c0_3 = arith.constant 0 : index
    %3 = vector.load %arg3[%c0_2, %c0_3] : memref<32x128xf32, #tpu.memory_space<vmem>>, vector<32x128xf32>
    %cst = arith.constant dense<0.000000e+00> : vector<8x128xf32>
    %4 = tpu.matmul %2, %3, %cst {dimension_numbers = #tpu.dot_dimension_numbers<[1], [0], [0], [1], [0, 0, 1, 1], [], []>} : vector<8x32xf32>, vector<32x128xf32>, vector<8x128xf32> -> vector<8x128xf32>
    %c0_4 = arith.constant 0 : index
    %c0_5 = arith.constant 0 : index
    %5 = vector.load %arg4[%c0_4, %c0_5] : memref<1x128xf32, #tpu.memory_space<vmem>>, vector<1x128xf32>
    %6 = vector.broadcast %5 : vector<1x128xf32> to vector<8x128xf32>
    %7 = arith.addf %4, %6 : vector<8x128xf32>
    %8 = tpu.iota {dimensions = array<i32: 0>} : vector<8x128xi32>
    %9 = vector.broadcast %1 : i32 to vector<8x128xi32>
    %10 = arith.addi %8, %9 : vector<8x128xi32>
    %11 = tpu.iota {dimensions = array<i32: 1>} : vector<8x128xi32>
    %c-1640531535_i32 = arith.constant -1640531535 : i32
    %12 = vector.broadcast %c-1640531535_i32 : i32 to vector<8x128xi32>
    %13 = arith.muli %10, %12 : vector<8x128xi32>
    %c-2048144789_i32 = arith.constant -2048144789 : i32
    %14 = vector.broadcast %c-2048144789_i32 : i32 to vector<8x128xi32>
    %15 = arith.muli %11, %14 : vector<8x128xi32>
    %16 = arith.addi %13, %15 : vector<8x128xi32>
    %c-1028477387_i32 = arith.constant -1028477387 : i32
    %17 = arith.muli %0, %c-1028477387_i32 : i32
    %18 = vector.broadcast %17 : i32 to vector<8x128xi32>
    %19 = arith.addi %16, %18 : vector<8x128xi32>
    %c4369_i32 = arith.constant 4369 : i32
    %20 = vector.broadcast %c4369_i32 : i32 to vector<8x128xi32>
    %21 = arith.addi %19, %20 : vector<8x128xi32>
    %c16_i32 = arith.constant 16 : i32
    %22 = vector.broadcast %c16_i32 : i32 to vector<8x128xi32>
    %23 = arith.shrui %21, %22 : vector<8x128xi32>
    %24 = arith.xori %21, %23 : vector<8x128xi32>
    %c2146121005_i32 = arith.constant 2146121005 : i32
    %25 = vector.broadcast %c2146121005_i32 : i32 to vector<8x128xi32>
    %26 = arith.muli %24, %25 : vector<8x128xi32>
    %c15_i32 = arith.constant 15 : i32
    %27 = vector.broadcast %c15_i32 : i32 to vector<8x128xi32>
    %28 = arith.shrui %26, %27 : vector<8x128xi32>
    %29 = arith.xori %26, %28 : vector<8x128xi32>
    %c-2073254261_i32 = arith.constant -2073254261 : i32
    %30 = vector.broadcast %c-2073254261_i32 : i32 to vector<8x128xi32>
    %31 = arith.muli %29, %30 : vector<8x128xi32>
    %c16_i32_6 = arith.constant 16 : i32
    %32 = vector.broadcast %c16_i32_6 : i32 to vector<8x128xi32>
    %33 = arith.shrui %31, %32 : vector<8x128xi32>
    %34 = arith.xori %31, %33 : vector<8x128xi32>
    %c1288490189_i32 = arith.constant 1288490189 : i32
    %35 = vector.broadcast %c1288490189_i32 : i32 to vector<8x128xi32>
    %36 = arith.cmpi uge, %34, %35 : vector<8x128xi32>
    %cst_7 = arith.constant 1.42857146 : f32
    %37 = vector.broadcast %cst_7 : f32 to vector<8x128xf32>
    %38 = arith.mulf %7, %37 : vector<8x128xf32>
    %cst_8 = arith.constant 0.000000e+00 : f32
    %39 = vector.broadcast %cst_8 : f32 to vector<8x128xf32>
    %40 = arith.select %36, %38, %39 : vector<8x128xi1>, vector<8x128xf32>
    %cst_9 = arith.constant 0.000000e+00 : f32
    %41 = vector.broadcast %cst_9 : f32 to vector<8x128xf32>
    %42 = arith.maximumf %40, %41 : vector<8x128xf32>
    %c0_10 = arith.constant 0 : index
    %c0_11 = arith.constant 0 : index
    %43 = vector.load %arg5[%c0_10, %c0_11] : memref<128x128xf32, #tpu.memory_space<vmem>>, vector<128x128xf32>
    %cst_12 = arith.constant dense<0.000000e+00> : vector<8x128xf32>
    %44 = tpu.matmul %42, %43, %cst_12 {dimension_numbers = #tpu.dot_dimension_numbers<[1], [0], [0], [1], [0, 0, 1, 1], [], []>} : vector<8x128xf32>, vector<128x128xf32>, vector<8x128xf32> -> vector<8x128xf32>
    %c0_13 = arith.constant 0 : index
    %c0_14 = arith.constant 0 : index
    %45 = vector.load %arg6[%c0_13, %c0_14] : memref<1x128xf32, #tpu.memory_space<vmem>>, vector<1x128xf32>
    %46 = vector.broadcast %45 : vector<1x128xf32> to vector<8x128xf32>
    %47 = arith.addf %44, %46 : vector<8x128xf32>
    %48 = tpu.iota {dimensions = array<i32: 0>} : vector<8x128xi32>
    %49 = vector.broadcast %1 : i32 to vector<8x128xi32>
    %50 = arith.addi %48, %49 : vector<8x128xi32>
    %51 = tpu.iota {dimensions = array<i32: 1>} : vector<8x128xi32>
    %c-1640531535_i32_15 = arith.constant -1640531535 : i32
    %52 = vector.broadcast %c-1640531535_i32_15 : i32 to vector<8x128xi32>
    %53 = arith.muli %50, %52 : vector<8x128xi32>
    %c-2048144789_i32_16 = arith.constant -2048144789 : i32
    %54 = vector.broadcast %c-2048144789_i32_16 : i32 to vector<8x128xi32>
    %55 = arith.muli %51, %54 : vector<8x128xi32>
    %56 = arith.addi %53, %55 : vector<8x128xi32>
    %c-1028477387_i32_17 = arith.constant -1028477387 : i32
    %57 = arith.muli %0, %c-1028477387_i32_17 : i32
    %58 = vector.broadcast %57 : i32 to vector<8x128xi32>
    %59 = arith.addi %56, %58 : vector<8x128xi32>
    %c8738_i32 = arith.constant 8738 : i32
    %60 = vector.broadcast %c8738_i32 : i32 to vector<8x128xi32>
    %61 = arith.addi %59, %60 : vector<8x128xi32>
    %c16_i32_18 = arith.constant 16 : i32
    %62 = vector.broadcast %c16_i32_18 : i32 to vector<8x128xi32>
    %63 = arith.shrui %61, %62 : vector<8x128xi32>
    %64 = arith.xori %61, %63 : vector<8x128xi32>
    %c2146121005_i32_19 = arith.constant 2146121005 : i32
    %65 = vector.broadcast %c2146121005_i32_19 : i32 to vector<8x128xi32>
    %66 = arith.muli %64, %65 : vector<8x128xi32>
    %c15_i32_20 = arith.constant 15 : i32
    %67 = vector.broadcast %c15_i32_20 : i32 to vector<8x128xi32>
    %68 = arith.shrui %66, %67 : vector<8x128xi32>
    %69 = arith.xori %66, %68 : vector<8x128xi32>
    %c-2073254261_i32_21 = arith.constant -2073254261 : i32
    %70 = vector.broadcast %c-2073254261_i32_21 : i32 to vector<8x128xi32>
    %71 = arith.muli %69, %70 : vector<8x128xi32>
    %c16_i32_22 = arith.constant 16 : i32
    %72 = vector.broadcast %c16_i32_22 : i32 to vector<8x128xi32>
    %73 = arith.shrui %71, %72 : vector<8x128xi32>
    %74 = arith.xori %71, %73 : vector<8x128xi32>
    %c1288490189_i32_23 = arith.constant 1288490189 : i32
    %75 = vector.broadcast %c1288490189_i32_23 : i32 to vector<8x128xi32>
    %76 = arith.cmpi uge, %74, %75 : vector<8x128xi32>
    %cst_24 = arith.constant 1.42857146 : f32
    %77 = vector.broadcast %cst_24 : f32 to vector<8x128xf32>
    %78 = arith.mulf %47, %77 : vector<8x128xf32>
    %cst_25 = arith.constant 0.000000e+00 : f32
    %79 = vector.broadcast %cst_25 : f32 to vector<8x128xf32>
    %80 = arith.select %76, %78, %79 : vector<8x128xi1>, vector<8x128xf32>
    %cst_26 = arith.constant 0.000000e+00 : f32
    %81 = vector.broadcast %cst_26 : f32 to vector<8x128xf32>
    %82 = arith.maximumf %80, %81 : vector<8x128xf32>
    %c0_27 = arith.constant 0 : index
    %c0_28 = arith.constant 0 : index
    %83 = vector.load %arg7[%c0_27, %c0_28] : memref<128x128xf32, #tpu.memory_space<vmem>>, vector<128x128xf32>
    %cst_29 = arith.constant dense<0.000000e+00> : vector<8x128xf32>
    %84 = tpu.matmul %82, %83, %cst_29 {dimension_numbers = #tpu.dot_dimension_numbers<[1], [0], [0], [1], [0, 0, 1, 1], [], []>} : vector<8x128xf32>, vector<128x128xf32>, vector<8x128xf32> -> vector<8x128xf32>
    %c0_30 = arith.constant 0 : index
    %c0_31 = arith.constant 0 : index
    %85 = vector.load %arg8[%c0_30, %c0_31] : memref<1x128xf32, #tpu.memory_space<vmem>>, vector<1x128xf32>
    %86 = vector.broadcast %85 : vector<1x128xf32> to vector<8x128xf32>
    %87 = arith.addf %84, %86 : vector<8x128xf32>
    %c0_32 = arith.constant 0 : index
    %c0_33 = arith.constant 0 : index
    %88 = vector.load %arg9[%c0_32, %c0_33] : memref<8x128xf32, #tpu.memory_space<vmem>>, vector<8x128xf32>
    tpu.vector_store %arg9[%c0_32, %c0_33], %87 {strides = array<i32>} : memref<8x128xf32, #tpu.memory_space<vmem>>, vector<8x128xf32>,
    return
  }
  func.func @transform_0(%arg0: i32) -> i32 {
    %c0_i32 = arith.constant 0 : i32
    %c0_i32_0 = arith.constant 0 : i32
    return %c0_i32 : i32
  }
  func.func @transform_1(%arg0: i32) -> (i32, i32) {
    %c0_i32 = arith.constant 0 : i32
    %c0_i32_0 = arith.constant 0 : i32
    return %arg0, %c0_i32 : i32, i32
  }
  func.func @transform_2(%arg0: i32) -> (i32, i32) {
    %c0_i32 = arith.constant 0 : i32
    %c0_i32_0 = arith.constant 0 : i32
    %c0_i32_1 = arith.constant 0 : i32
    return %c0_i32, %c0_i32_0 : i32, i32
  }
  func.func @transform_3(%arg0: i32) -> (i32, i32) {
    %c0_i32 = arith.constant 0 : i32
    %c0_i32_0 = arith.constant 0 : i32
    %c0_i32_1 = arith.constant 0 : i32
    return %c0_i32, %c0_i32_0 : i32, i32
  }
  func.func @transform_4(%arg0: i32) -> (i32, i32) {
    %c0_i32 = arith.constant 0 : i32
    %c0_i32_0 = arith.constant 0 : i32
    %c0_i32_1 = arith.constant 0 : i32
    return %c0_i32, %c0_i32_0 : i32, i32
  }
  func.func @transform_5(%arg0: i32) -> (i32, i32) {
    %c0_i32 = arith.constant 0 : i32
    %c0_i32_0 = arith.constant 0 : i32
    %c0_i32_1 = arith.constant 0 : i32
    return %c0_i32, %c0_i32_0 : i32, i32
  }
  func.func @transform_6(%arg0: i32) -> (i32, i32) {
    %c0_i32 = arith.constant 0 : i32
    %c0_i32_0 = arith.constant 0 : i32
    %c0_i32_1 = arith.constant 0 : i32
    return %c0_i32, %c0_i32_0 : i32, i32
  }
  func.func @transform_7(%arg0: i32) -> (i32, i32) {
    %c0_i32 = arith.constant 0 : i32
    %c0_i32_0 = arith.constant 0 : i32
    %c0_i32_1 = arith.constant 0 : i32
    return %c0_i32, %c0_i32_0 : i32, i32
  }
  func.func @transform_8(%arg0: i32) -> (i32, i32) {
    %c0_i32 = arith.constant 0 : i32
    %c0_i32_0 = arith.constant 0 : i32
    return %arg0, %c0_i32 : i32, i32
  }
}

</mosaic_0001>

<llo_original>
// kernel: tpu_custom_call.1
$region0: #{tpu_custom_call.1}
  #allocation0 [shape = 'u32[]', space=smem, size = 0x4, offset = 0x4, fixed_abs, tag = 'smem constant byte address 0x4 - core index']
  #allocation1 [shape = 'u32[144,128]{1,0:T(1,128)}', space=vmem, size = 0x12000, scoped, tag = 'internal scratch']
  #allocation2 [shape = 's32[1]{0:T(128)S(6)}', space=smem, size = 0x200, scoped, tag = 'scoped memory for tpu_custom_call.1']
  %s0 = inlined_call_operand.<no memory space> [shape: s32[1], index: 0, kind: input, shape index: {}]
  %s1 = inlined_call_operand.hbm [shape: f32[8,32], index: 1, kind: input, shape index: {}]
  %s2 = inlined_call_operand.hbm [shape: f32[32,128], index: 2, kind: input, shape index: {}]
  %s3 = inlined_call_operand.vmem [shape: f32[1,128], index: 3, kind: input, shape index: {}]
  %s4 = inlined_call_operand.hbm [shape: f32[128,128], index: 4, kind: input, shape index: {}]
  %s5 = inlined_call_operand.vmem [shape: f32[1,128], index: 5, kind: input, shape index: {}]
  %s6 = inlined_call_operand.hbm [shape: f32[128,128], index: 6, kind: input, shape index: {}]
  %s7 = inlined_call_operand.vmem [shape: f32[1,128], index: 7, kind: input, shape index: {}]
  %s8 = inlined_call_operand.hbm [shape: f32[8,128], index: 8, kind: output, shape index: {}]
  %s9 = sld [smem:[#allocation0]]
  $region58: #{tpu_custom_call.1} parent=0
    _
  %s11 = ssub.s32 1, %s9
  %s12 = scalar_select 0, %s11, %s9
  %13 = sst [smem:[#allocation2]] %s0
  $region1: #{tpu_custom_call.1} parent=0
    #allocation3 [shape = 'u8[4096]{0}', space=vmem, size = 0x1000, scoped, tag = 'input window, operand 1, single buffered']
    #allocation4 [shape = 's32[1]{0}', space=sflag, size = 0x4, scoped, tag = 'scoped memory for tpu_custom_call.1']
    #allocation5 [shape = 's32[1]{0}', space=sflag, size = 0x4, scoped, tag = 'scoped memory for tpu_custom_call.1']
    #allocation6 [shape = 'u8[16384]{0}', space=vmem, size = 0x4000, scoped, tag = 'input window, operand 2, single buffered']
    #allocation7 [shape = 's32[1]{0}', space=sflag, size = 0x4, scoped, tag = 'scoped memory for tpu_custom_call.1']
    #allocation8 [shape = 'u8[65536]{0}', space=vmem, size = 0x10000, scoped, tag = 'input window, operand 4, single buffered']
    #allocation9 [shape = 'u8[65536]{0}', space=vmem, size = 0x10000, scoped, tag = 'input window, operand 6, single buffered']
    #allocation10 [shape = 's32[1]{0}', space=sflag, size = 0x4, scoped, tag = 'scoped memory for tpu_custom_call.1']
    #allocation11 [shape = 'u8[4096]{0}', space=vmem, size = 0x1000, scoped, tag = 'output window, operand 0, single buffered']
    %14 = vsyncpa [#allocation4], 0
    %15 = vsyncpa [#allocation7], 0
    %16 = vsyncpa [#allocation10], 0
    %17 = vsyncpa [#allocation5], 0
    // Predicated region
    $region2: #{tpu_custom_call.1} parent=1 // pred_check
      _
    $region3: #{tpu_custom_call.1} parent=1 // pred_check_branch
      %19 = sbr.rel (0) target = $region5
    $region4: #{tpu_custom_call.1} parent=1 // pred_region
      _
    $region5: #{tpu_custom_call.1} parent=1 // pred_fallthru
      _
    // Predicated region
    $region6: #{tpu_custom_call.1} parent=1 // pred_check
      _
    $region7: #{tpu_custom_call.1} parent=1 // pred_check_branch
      %21 = sbr.rel (0) target = $region9
    $region8: #{tpu_custom_call.1} parent=1 // pred_region
      %s23 = ssub.s32 128, 128
      %24 = vsyncadd [#allocation4], %s23
      %s26 = sshll.u32 [#allocation3], 4
      %s27 = int_to_ptr.vmem [resolvable:$true] %s26
      %29 = dma.hbm_to_vmem [thread:$0]  %s1, 128, %s27, [#allocation4]
    $region9: #{tpu_custom_call.1} parent=1 // pred_fallthru
      _
    // Predicated region
    $region10: #{tpu_custom_call.1} parent=1 // pred_check
      _
    $region11: #{tpu_custom_call.1} parent=1 // pred_check_branch
      %31 = sbr.rel (0) target = $region13
    $region12: #{tpu_custom_call.1} parent=1 // pred_region
      %s33 = ssub.s32 512, 512
      %34 = vsyncadd [#allocation7], %s33
      %s35 = sshll.u32 [#allocation6], 4
      %s36 = int_to_ptr.vmem [resolvable:$true] %s35
      %41 = dma.hbm_to_vmem [thread:$0]  %s2, 512, %s36, [#allocation7], 128, 128, 8
    $region13: #{tpu_custom_call.1} parent=1 // pred_fallthru
      _
    // Predicated region
    $region14: #{tpu_custom_call.1} parent=1 // pred_check
      _
    $region15: #{tpu_custom_call.1} parent=1 // pred_check_branch
      %43 = sbr.rel (0) target = $region17
    $region16: #{tpu_custom_call.1} parent=1 // pred_region
      _
    $region17: #{tpu_custom_call.1} parent=1 // pred_fallthru
      _
    // Predicated region
    $region18: #{tpu_custom_call.1} parent=1 // pred_check
      _
    $region19: #{tpu_custom_call.1} parent=1 // pred_check_branch
      %45 = sbr.rel (0) target = $region21
    $region20: #{tpu_custom_call.1} parent=1 // pred_region
      %s47 = ssub.s32 2048, 2048
      %48 = vsyncadd [#allocation7], %s47
      %s49 = sshll.u32 [#allocation8], 4
      %s50 = int_to_ptr.vmem [resolvable:$true] %s49
      %55 = dma.hbm_to_vmem [thread:$0]  %s4, 2048, %s50, [#allocation7], 128, 128, 8
    $region21: #{tpu_custom_call.1} parent=1 // pred_fallthru
      _
    // Predicated region
    $region22: #{tpu_custom_call.1} parent=1 // pred_check
      _
    $region23: #{tpu_custom_call.1} parent=1 // pred_check_branch
      %57 = sbr.rel (0) target = $region25
    $region24: #{tpu_custom_call.1} parent=1 // pred_region
      _
    $region25: #{tpu_custom_call.1} parent=1 // pred_fallthru
      _
    // Predicated region
    $region26: #{tpu_custom_call.1} parent=1 // pred_check
      _
    $region27: #{tpu_custom_call.1} parent=1 // pred_check_branch
      %59 = sbr.rel (0) target = $region29
    $region28: #{tpu_custom_call.1} parent=1 // pred_region
      %s61 = ssub.s32 2048, 2048
      %62 = vsyncadd [#allocation10], %s61
      %s63 = sshll.u32 [#allocation9], 4
      %s64 = int_to_ptr.vmem [resolvable:$true] %s63
      %69 = dma.hbm_to_vmem [thread:$0]  %s6, 2048, %s64, [#allocation10], 128, 128, 8
    $region29: #{tpu_custom_call.1} parent=1 // pred_fallthru
      _
    // Predicated region
    $region30: #{tpu_custom_call.1} parent=1 // pred_check
      _
    $region31: #{tpu_custom_call.1} parent=1 // pred_check_branch
      %71 = sbr.rel (0) target = $region33
    $region32: #{tpu_custom_call.1} parent=1 // pred_region
      _
    $region33: #{tpu_custom_call.1} parent=1 // pred_fallthru
      _
    // Predicated region
    $region34: #{tpu_custom_call.1} parent=1 // pred_check
      _
    $region35: #{tpu_custom_call.1} parent=1 // pred_check_branch
      %73 = sbr.rel (0) target = $region37
    $region36: #{tpu_custom_call.1} parent=1 // pred_region
      %74 = dma.done [#allocation4], 128
    $region37: #{tpu_custom_call.1} parent=1 // pred_fallthru
      _
    // Predicated region
    $region38: #{tpu_custom_call.1} parent=1 // pred_check
      _
    $region39: #{tpu_custom_call.1} parent=1 // pred_check_branch
      %76 = sbr.rel (0) target = $region41
    $region40: #{tpu_custom_call.1} parent=1 // pred_region
      %77 = dma.done [#allocation7], 512
    $region41: #{tpu_custom_call.1} parent=1 // pred_fallthru
      _
    // Predicated region
    $region42: #{tpu_custom_call.1} parent=1 // pred_check
      _
    $region43: #{tpu_custom_call.1} parent=1 // pred_check_branch
      %79 = sbr.rel (0) target = $region45
    $region44: #{tpu_custom_call.1} parent=1 // pred_region
      %80 = dma.done [#allocation7], 2048
    $region45: #{tpu_custom_call.1} parent=1 // pred_fallthru
      _
    // Predicated region
    $region46: #{tpu_custom_call.1} parent=1 // pred_check
      _
    $region47: #{tpu_custom_call.1} parent=1 // pred_check_branch
      %82 = sbr.rel (0) target = $region49
    $region48: #{tpu_custom_call.1} parent=1 // pred_region
      %83 = dma.done [#allocation10], 2048
    $region49: #{tpu_custom_call.1} parent=1 // pred_fallthru
      _
    %s84 = sld [smem:[#allocation2]]
    %s85 = smul.u32 0, 8
    %v86 = vld [vmem:[#allocation3] sm:$0xff]
    %v87 = vld [vmem:[#allocation6] sm:$0xff]
    %v88 = vld [vmem:[#allocation6 + $0x8] sm:$0xff]
    %v89 = vld [vmem:[#allocation6 + $0x10] sm:$0xff]
    %v90 = vld [vmem:[#allocation6 + $0x18] sm:$0xff]
    %v91 = vld [vmem:[%s3] sm:$0x1]
    %v93 = vlaneseq
    %v94 = vshrl.u32 %v93, 7
    %v95 = vsub.s32 0, %v94
    %v96 = vrot.slane %v91, %v95
    %vm98 = vcmask 261120
    %v100 = vsel %vm98, %v86, 0
    %102 = vmatprep.subr.mxu0 0.0
    %103 = vmatpush1.msra.mxu0 %v87
    %104 = vmatprep.subr.mxu0 0.0
    %105 = vmatpush1.msra.mxu0 %v88
    %106 = vmatprep.subr.mxu0 0.0
    %107 = vmatpush1.msra.mxu0 %v89
    %108 = vmatprep.subr.mxu0 0.0
    %109 = vmatpush1.msra.mxu0 %v90
    %110 = vmatprep.subr.mxu0 0.0
    %111 = vmatpush1.msra.mxu0 0.0
    %112 = vmatprep.subr.mxu0 0.0
    %113 = vmatpush1.msra.mxu0 0.0
    %114 = vmatprep.subr.mxu0 0.0
    %115 = vmatpush1.msra.mxu0 0.0
    %116 = vmatprep.subr.mxu0 0.0
    %117 = vmatpush1.msra.mxu0 0.0
    %118 = vmatprep.subr.mxu0 0.0
    %119 = vmatpush1.msra.mxu0 0.0
    %120 = vmatprep.subr.mxu0 0.0
    %121 = vmatpush1.msra.mxu0 0.0
    %122 = vmatprep.subr.mxu0 0.0
    %123 = vmatpush1.msra.mxu0 0.0
    %124 = vmatprep.subr.mxu0 0.0
    %125 = vmatpush1.msra.mxu0 0.0
    %126 = vmatprep.subr.mxu0 0.0
    %127 = vmatpush1.msra.mxu0 0.0
    %128 = vmatprep.subr.mxu0 0.0
    %129 = vmatpush1.msra.mxu0 0.0
    %130 = vmatprep.subr.mxu0 0.0
    %131 = vmatpush1.msra.mxu0 0.0
    %132 = vmatprep.subr.mxu0 0.0
    %133 = vmatpush1.msra.mxu0 0.0
    %134 = vmatprep.subr.mxu0 0.0
    %135 = vmatpush1.msra.mxu0 0.0
    %136 = vmatprep.subr.mxu0 0.0
    %137 = vmatpush1.msra.mxu0 0.0
    %138 = vmatprep.subr.mxu0 0.0
    %139 = vmatpush1.msra.mxu0 0.0
    %140 = vmatprep.subr.mxu0 0.0
    %141 = vmatpush1.msra.mxu0 0.0
    %142 = vmatprep.subr.mxu0 0.0
    %143 = vmatpush1.msra.mxu0 0.0
    %144 = vmatprep.subr.mxu0 0.0
    %145 = vmatpush1.msra.mxu0 0.0
    %146 = vmatprep.subr.mxu0 0.0
    %147 = vmatpush1.msra.mxu0 0.0
    %148 = vmatprep.subr.mxu0 0.0
    %149 = vmatpush1.msra.mxu0 0.0
    %150 = vmatprep.subr.mxu0 0.0
    %151 = vmatpush1.msra.mxu0 0.0
    %152 = vmatprep.subr.mxu0 0.0
    %153 = vmatpush1.msra.mxu0 0.0
    %154 = vmatprep.subr.mxu0 0.0
    %155 = vmatpush1.msra.mxu0 0.0
    %156 = vmatprep.subr.mxu0 0.0
    %157 = vmatpush1.msra.mxu0 0.0
    %158 = vmatprep.subr.mxu0 0.0
    %159 = vmatpush1.msra.mxu0 0.0
    %160 = vmatprep.subr.mxu0 0.0
    %161 = vmatpush1.msra.mxu0 0.0
    %162 = vmatprep.subr.mxu0 0.0
    %163 = vmatpush1.msra.mxu0 0.0
    %164 = vmatprep.subr.mxu0 0.0
    %165 = vmatpush1.msra.mxu0 0.0
    %166 = vmatprep.mubr.f32.mxu0 0.0
    %167 = vmatmul.mubr.f32.gmra.mrb[0].mxu0 %v100
    %v168 = vpop.f32.mrb[0].mxu0
    %v169 = vadd.f32 %v96, %v168
    %v170 = vpop.f32.mrb[0].mxu0
    %171 = vdwg.mxu0
    %v172 = vlaneseq
    %v173 = vshrl.u32 %v172, 7
    %v174 = vstv %s85
    %v175 = vadd.s32 %v173, %v174
    %v176 = vlaneseq
    %v177 = vand.u32 %v176, 127
    %v178 = vmul.u32 %v175, 2654435761
    %v179 = vmul.u32 %v177, 2246822507
    %v180 = vadd.s32 %v178, %v179
    %s181 = smul.u32 %s84, 3266489909
    %v182 = vstv %s181
    %v183 = vadd.s32 %v180, %v182
    %v184 = vadd.s32 %v183, 4369
    %v185 = vshrl.u32 %v184, 16
    %v186 = vxor.u32 %v184, %v185
    %v187 = vmul.u32 %v186, 2146121005
    %v188 = vshrl.u32 %v187, 15
    %v189 = vxor.u32 %v187, %v188
    %v190 = vmul.u32 %v189, 2221713035
    %v191 = vshrl.u32 %v190, 16
    %v192 = vxor.u32 %v190, %v191
    %vm193 = vcmp.ge.u32.totalorder %v192, 1288490189
    %v194 = vmul.f32 %v169, 1.4285715
    %v195 = vsel %vm193, %v194, 0.0
    %v196 = vmax.f32 %v195, 0.0
    %v197 = vld [vmem:[#allocation8] sm:$0xff]
    %v198 = vld [vmem:[#allocation8 + $0x8] sm:$0xff]
    %v199 = vld [vmem:[#allocation8 + $0x10] sm:$0xff]
    %v200 = vld [vmem:[#allocation8 + $0x18] sm:$0xff]
    %v201 = vld [vmem:[#allocation8 + $0x20] sm:$0xff]
    %v202 = vld [vmem:[#allocation8 + $0x28] sm:$0xff]
    %v203 = vld [vmem:[#allocation8 + $0x30] sm:$0xff]
    %v204 = vld [vmem:[#allocation8 + $0x38] sm:$0xff]
    %v205 = vld [vmem:[#allocation8 + $0x40] sm:$0xff]
    %v206 = vld [vmem:[#allocation8 + $0x48] sm:$0xff]
    %v207 = vld [vmem:[#allocation8 + $0x50] sm:$0xff]
    %v208 = vld [vmem:[#allocation8 + $0x58] sm:$0xff]
    %v209 = vld [vmem:[#allocation8 + $0x60] sm:$0xff]
    %v210 = vld [vmem:[#allocation8 + $0x68] sm:$0xff]
    %v211 = vld [vmem:[#allocation8 + $0x70] sm:$0xff]
    %v212 = vld [vmem:[#allocation8 + $0x78] sm:$0xff]
    %v213 = vld [vmem:[%s5] sm:$0x1]
    %v215 = vlaneseq
    %v216 = vshrl.u32 %v215, 7
    %v217 = vsub.s32 0, %v216
    %v218 = vrot.slane %v213, %v217
    %220 = vmatprep.subr.mxu0 0.0
    %221 = vmatpush1.msra.mxu0 %v197
    %222 = vmatprep.subr.mxu0 0.0
    %223 = vmatpush1.msra.mxu0 %v198
    %224 = vmatprep.subr.mxu0 0.0
    %225 = vmatpush1.msra.mxu0 %v199
    %226 = vmatprep.subr.mxu0 0.0
    %227 = vmatpush1.msra.mxu0 %v200
    %228 = vmatprep.subr.mxu0 0.0
    %229 = vmatpush1.msra.mxu0 %v201
    %230 = vmatprep.subr.mxu0 0.0
    %231 = vmatpush1.msra.mxu0 %v202
    %232 = vmatprep.subr.mxu0 0.0
    %233 = vmatpush1.msra.mxu0 %v203
    %234 = vmatprep.subr.mxu0 0.0
    %235 = vmatpush1.msra.mxu0 %v204
    %236 = vmatprep.subr.mxu0 0.0
    %237 = vmatpush1.msra.mxu0 %v205
    %238 = vmatprep.subr.mxu0 0.0
    %239 = vmatpush1.msra.mxu0 %v206
    %240 = vmatprep.subr.mxu0 0.0
    %241 = vmatpush1.msra.mxu0 %v207
    %242 = vmatprep.subr.mxu0 0.0
    %243 = vmatpush1.msra.mxu0 %v208
    %244 = vmatprep.subr.mxu0 0.0
    %245 = vmatpush1.msra.mxu0 %v209
    %246 = vmatprep.subr.mxu0 0.0
    %247 = vmatpush1.msra.mxu0 %v210
    %248 = vmatprep.subr.mxu0 0.0
    %249 = vmatpush1.msra.mxu0 %v211
    %250 = vmatprep.subr.mxu0 0.0
    %251 = vmatpush1.msra.mxu0 %v212
    %252 = vmatprep.subr.mxu0 0.0
    %253 = vmatpush1.msra.mxu0 0.0
    %254 = vmatprep.subr.mxu0 0.0
    %255 = vmatpush1.msra.mxu0 0.0
    %256 = vmatprep.subr.mxu0 0.0
    %257 = vmatpush1.msra.mxu0 0.0
    %258 = vmatprep.subr.mxu0 0.0
    %259 = vmatpush1.msra.mxu0 0.0
    %260 = vmatprep.subr.mxu0 0.0
    %261 = vmatpush1.msra.mxu0 0.0
    %262 = vmatprep.subr.mxu0 0.0
    %263 = vmatpush1.msra.mxu0 0.0
    %264 = vmatprep.subr.mxu0 0.0
    %265 = vmatpush1.msra.mxu0 0.0
    %266 = vmatprep.subr.mxu0 0.0
    %267 = vmatpush1.msra.mxu0 0.0
    %268 = vmatprep.subr.mxu0 0.0
    %269 = vmatpush1.msra.mxu0 0.0
    %270 = vmatprep.subr.mxu0 0.0
    %271 = vmatpush1.msra.mxu0 0.0
    %272 = vmatprep.subr.mxu0 0.0
    %273 = vmatpush1.msra.mxu0 0.0
    %274 = vmatprep.subr.mxu0 0.0
    %275 = vmatpush1.msra.mxu0 0.0
    %276 = vmatprep.subr.mxu0 0.0
    %277 = vmatpush1.msra.mxu0 0.0
    %278 = vmatprep.subr.mxu0 0.0
    %279 = vmatpush1.msra.mxu0 0.0
    %280 = vmatprep.subr.mxu0 0.0
    %281 = vmatpush1.msra.mxu0 0.0
    %282 = vmatprep.subr.mxu0 0.0
    %283 = vmatpush1.msra.mxu0 0.0
    %284 = vmatprep.mubr.f32.mxu0 0.0
    %285 = vmatmul.mubr.f32.gmra.mrb[0].mxu0 %v196
    %v286 = vpop.f32.mrb[0].mxu0
    %v287 = vadd.f32 %v218, %v286
    %v288 = vpop.f32.mrb[0].mxu0
    %289 = vdwg.mxu0
    %v290 = vadd.s32 %v183, 8738
    %v291 = vshrl.u32 %v290, 16
    %v292 = vxor.u32 %v290, %v291
    %v293 = vmul.u32 %v292, 2146121005
    %v294 = vshrl.u32 %v293, 15
    %v295 = vxor.u32 %v293, %v294
    %v296 = vmul.u32 %v295, 2221713035
    %v297 = vshrl.u32 %v296, 16
    %v298 = vxor.u32 %v296, %v297
    %vm299 = vcmp.ge.u32.totalorder %v298, 1288490189
    %v300 = vmul.f32 %v287, 1.4285715
    %v301 = vsel %vm299, %v300, 0.0
    %v302 = vmax.f32 %v301, 0.0
    %v303 = vld [vmem:[#allocation9] sm:$0xff]
    %v304 = vld [vmem:[#allocation9 + $0x8] sm:$0xff]
    %v305 = vld [vmem:[#allocation9 + $0x10] sm:$0xff]
    %v306 = vld [vmem:[#allocation9 + $0x18] sm:$0xff]
    %v307 = vld [vmem:[#allocation9 + $0x20] sm:$0xff]
    %v308 = vld [vmem:[#allocation9 + $0x28] sm:$0xff]
    %v309 = vld [vmem:[#allocation9 + $0x30] sm:$0xff]
    %v310 = vld [vmem:[#allocation9 + $0x38] sm:$0xff]
    %v311 = vld [vmem:[#allocation9 + $0x40] sm:$0xff]
    %v312 = vld [vmem:[#allocation9 + $0x48] sm:$0xff]
    %v313 = vld [vmem:[#allocation9 + $0x50] sm:$0xff]
    %v314 = vld [vmem:[#allocation9 + $0x58] sm:$0xff]
    %v315 = vld [vmem:[#allocation9 + $0x60] sm:$0xff]
    %v316 = vld [vmem:[#allocation9 + $0x68] sm:$0xff]
    %v317 = vld [vmem:[#allocation9 + $0x70] sm:$0xff]
    %v318 = vld [vmem:[#allocation9 + $0x78] sm:$0xff]
    %v319 = vld [vmem:[%s7] sm:$0x1]
    %v321 = vlaneseq
    %v322 = vshrl.u32 %v321, 7
    %v323 = vsub.s32 0, %v322
    %v324 = vrot.slane %v319, %v323
    %326 = vmatprep.subr.mxu0 0.0
    %327 = vmatpush1.msra.mxu0 %v303
    %328 = vmatprep.subr.mxu0 0.0
    %329 = vmatpush1.msra.mxu0 %v304
    %330 = vmatprep.subr.mxu0 0.0
    %331 = vmatpush1.msra.mxu0 %v305
    %332 = vmatprep.subr.mxu0 0.0
    %333 = vmatpush1.msra.mxu0 %v306
    %334 = vmatprep.subr.mxu0 0.0
    %335 = vmatpush1.msra.mxu0 %v307
    %336 = vmatprep.subr.mxu0 0.0
    %337 = vmatpush1.msra.mxu0 %v308
    %338 = vmatprep.subr.mxu0 0.0
    %339 = vmatpush1.msra.mxu0 %v309
    %340 = vmatprep.subr.mxu0 0.0
    %341 = vmatpush1.msra.mxu0 %v310
    %342 = vmatprep.subr.mxu0 0.0
    %343 = vmatpush1.msra.mxu0 %v311
    %344 = vmatprep.subr.mxu0 0.0
    %345 = vmatpush1.msra.mxu0 %v312
    %346 = vmatprep.subr.mxu0 0.0
    %347 = vmatpush1.msra.mxu0 %v313
    %348 = vmatprep.subr.mxu0 0.0
    %349 = vmatpush1.msra.mxu0 %v314
    %350 = vmatprep.subr.mxu0 0.0
    %351 = vmatpush1.msra.mxu0 %v315
    %352 = vmatprep.subr.mxu0 0.0
    %353 = vmatpush1.msra.mxu0 %v316
    %354 = vmatprep.subr.mxu0 0.0
    %355 = vmatpush1.msra.mxu0 %v317
    %356 = vmatprep.subr.mxu0 0.0
    %357 = vmatpush1.msra.mxu0 %v318
    %358 = vmatprep.subr.mxu0 0.0
    %359 = vmatpush1.msra.mxu0 0.0
    %360 = vmatprep.subr.mxu0 0.0
    %361 = vmatpush1.msra.mxu0 0.0
    %362 = vmatprep.subr.mxu0 0.0
    %363 = vmatpush1.msra.mxu0 0.0
    %364 = vmatprep.subr.mxu0 0.0
    %365 = vmatpush1.msra.mxu0 0.0
    %366 = vmatprep.subr.mxu0 0.0
    %367 = vmatpush1.msra.mxu0 0.0
    %368 = vmatprep.subr.mxu0 0.0
    %369 = vmatpush1.msra.mxu0 0.0
    %370 = vmatprep.subr.mxu0 0.0
    %371 = vmatpush1.msra.mxu0 0.0
    %372 = vmatprep.subr.mxu0 0.0
    %373 = vmatpush1.msra.mxu0 0.0
    %374 = vmatprep.subr.mxu0 0.0
    %375 = vmatpush1.msra.mxu0 0.0
    %376 = vmatprep.subr.mxu0 0.0
    %377 = vmatpush1.msra.mxu0 0.0
    %378 = vmatprep.subr.mxu0 0.0
    %379 = vmatpush1.msra.mxu0 0.0
    %380 = vmatprep.subr.mxu0 0.0
    %381 = vmatpush1.msra.mxu0 0.0
    %382 = vmatprep.subr.mxu0 0.0
    %383 = vmatpush1.msra.mxu0 0.0
    %384 = vmatprep.subr.mxu0 0.0
    %385 = vmatpush1.msra.mxu0 0.0
    %386 = vmatprep.subr.mxu0 0.0
    %387 = vmatpush1.msra.mxu0 0.0
    %388 = vmatprep.subr.mxu0 0.0
    %389 = vmatpush1.msra.mxu0 0.0
    %390 = vmatprep.mubr.f32.mxu0 0.0
    %391 = vmatmul.mubr.f32.gmra.mrb[0].mxu0 %v302
    %v392 = vpop.f32.mrb[0].mxu0
    %v393 = vadd.f32 %v324, %v392
    %v394 = vpop.f32.mrb[0].mxu0
    %395 = vdwg.mxu0
    %396 = vst [vmem:[#allocation11] sm:$0xff] %v393
    // Predicated region
    $region50: #{tpu_custom_call.1} parent=1 // pred_check
      _
    $region51: #{tpu_custom_call.1} parent=1 // pred_check_branch
      %398 = sbr.rel (0) target = $region53
    $region52: #{tpu_custom_call.1} parent=1 // pred_region
      %s400 = ssub.s32 128, 128
      %401 = vsyncadd [#allocation5], %s400
      %s403 = sshll.u32 [#allocation11], 4
      %s404 = int_to_ptr.vmem [resolvable:$true] %s403
      %406 = dma.vmem_to_hbm [thread:$0]  %s404, 128, %s8, [#allocation5]
    $region53: #{tpu_custom_call.1} parent=1 // pred_fallthru
      _
    // Predicated region
    $region54: #{tpu_custom_call.1} parent=1 // pred_check
      _
    $region55: #{tpu_custom_call.1} parent=1 // pred_check_branch
      %408 = sbr.rel (0) target = $region57
    $region56: #{tpu_custom_call.1} parent=1 // pred_region
      %409 = dma.done [#allocation5], 128
    $region57: #{tpu_custom_call.1} parent=1 // pred_fallthru
      _
    %410 = vsyncpa [#allocation4], 1
    %411 = vsyncpa [#allocation7], 1
    %412 = vsyncpa [#allocation10], 1
    %413 = vsyncpa [#allocation5], 1

</llo_original>
